<compile_context>
chip_gen: v5e
topology: v5e:2x2
jax: 0.10.0
libtpu: 0.0.40
codegen_flags: <defaults>
</compile_context>

<pallas_src>
import math

import jax
import jax.numpy as jnp
from jax.experimental import pallas as pl
from jax.experimental.pallas import tpu as pltpu

SQRT2 = math.sqrt(2.0)
LRELU_SLOPE = 0.2


def _round8(n):
    return ((n + 7) // 8) * 8


def _make_refiner_kernel(H, W, Cin, Cmid, Cp1, Cp2, offs):
    P = H * W
    PADLEN = P + 2 * W + 2
    TAPS = [(dy, dx) for dy in (-1, 0, 1) for dx in (-1, 0, 1)]

    def kernel(x_ref, vec_ref, w1_ref, w2_ref, w3_ref, o_ref, pad1_ref, pad2_ref):
        # lane-position wrap masks for the flat (row-stride == W) padded layout
        col = jax.lax.broadcasted_iota(jnp.int32, (1, P), 1) % W
        left = col == 0
        right = col == W - 1

        # folded per-batch vectors (modulation scales, demod coeffs, biases)
        v = vec_ref[0]                                   # (NV, 1)
        s1 = v[offs["s1"]:offs["s1"] + Cin, :]
        d1 = v[offs["d1"]:offs["d1"] + Cmid, :]
        b1 = v[offs["b1"]:offs["b1"] + Cmid, :]
        s2 = v[offs["s2"]:offs["s2"] + Cmid, :]
        d2 = v[offs["d2"]:offs["d2"] + Cmid, :]
        b2 = v[offs["b2"]:offs["b2"] + Cmid, :]
        s3 = v[offs["s3"]:offs["s3"] + Cmid, :]
        b3 = v[offs["b3"]:offs["b3"] + 3, :]

        def prep_pad(pad_ref, data):
            # Zero only the border regions (interior is fully overwritten) and
            # the channel-padding rows, then write the modulated feature map.
            cp = pad_ref.shape[0]
            c = data.shape[0]
            zb = jnp.zeros((cp, W + 1), jnp.float32)
            pad_ref[:, 0:W + 1] = zb
            pad_ref[:, W + 1 + P:PADLEN] = zb
            if cp > c:
                pad_ref[c:cp, W + 1:W + 1 + P] = jnp.zeros((cp - c, P), jnp.float32)
            pad_ref[0:c, W + 1:W + 1 + P] = data

        def conv3x3(pad_ref, w):
            # Build (9*Cpad, P) tap-concatenated staging and do ONE MXU matmul.
            patches = []
            for dy, dx in TAPS:
                start = (W + 1) + dy * W + dx            # static shift in flat index
                patch = pad_ref[:, start:start + P]      # (Cpad, P)
                if dx == -1:                             # mask wrap at left border
                    patch = jnp.where(left, 0.0, patch)
                elif dx == 1:                            # mask wrap at right border
                    patch = jnp.where(right, 0.0, patch)
                patches.append(patch)
            stg = jnp.concatenate(patches, axis=0)       # (9*Cpad, P)
            return jnp.dot(w, stg, preferred_element_type=jnp.float32)

        def fused_lrelu(y, d, b):
            y = y * d + b
            return jnp.where(y >= 0.0, y, LRELU_SLOPE * y) * SQRT2

        # ---- StyledConv 1: modulated 3x3 conv + demod + FusedLeakyReLU ----
        prep_pad(pad1_ref, x_ref[0] * s1)
        y = fused_lrelu(conv3x3(pad1_ref, w1_ref[...]), d1, b1)     # (Cmid, P)
        # TODO(synk): NoiseInjection omitted — its weight is zero-initialized,
        # so at init it is the identity.

        # ---- StyledConv 2 ----
        prep_pad(pad2_ref, y * s2)
        y = fused_lrelu(conv3x3(pad2_ref, w2_ref[...]), d2, b2)     # (Cmid, P)

        # ---- ToRGB: modulated 1x1 conv (no demod) + bias, then residual ----
        rgb = jnp.dot(w3_ref[...], y * s3,
                      preferred_element_type=jnp.float32) + b3       # (3, P)
        o_ref[0] = x_ref[0] + rgb                                    # lane-dense store

    return kernel


def init_params(key, in_channels, out_channels, style_dim):
    ks = jax.random.split(key, 6)
    return dict(
        mod1_w=jax.random.normal(ks[0], (in_channels, style_dim), jnp.float32),
        mod1_b=jnp.ones((in_channels,), jnp.float32),
        conv1_w=jax.random.normal(ks[1], (out_channels, in_channels, 3, 3), jnp.float32),
        act1_b=jnp.zeros((out_channels,), jnp.float32),
        mod2_w=jax.random.normal(ks[2], (out_channels, style_dim), jnp.float32),
        mod2_b=jnp.ones((out_channels,), jnp.float32),
        conv2_w=jax.random.normal(ks[3], (out_channels, out_channels, 3, 3), jnp.float32),
        act2_b=jnp.zeros((out_channels,), jnp.float32),
        mod3_w=jax.random.normal(ks[4], (out_channels, style_dim), jnp.float32),
        mod3_b=jnp.ones((out_channels,), jnp.float32),
        conv3_w=jax.random.normal(ks[5], (3, out_channels, 1, 1), jnp.float32),
        rgb_b=jnp.zeros((3,), jnp.float32),
    )


def _modulation(style, w, b):
    # EqualLinear(style_dim, C, bias_init=1)
    scale = 1.0 / math.sqrt(w.shape[1])
    return style @ (w.T * scale) + b


def _pack_conv_weight(w, cpad):
    # (O, I, 3, 3) -> (O, 9*cpad), tap-major along K, channels zero-padded to cpad.
    O, I = w.shape[0], w.shape[1]
    wt = jnp.transpose(w, (0, 2, 3, 1))                  # (O, ky, kx, I)
    if cpad > I:
        wt = jnp.pad(wt, ((0, 0), (0, 0), (0, 0), (0, cpad - I)))
    return wt.reshape(O, 9 * cpad)


def refiner_forward(x_nchw, style, params):
    B, Cin, H, W = x_nchw.shape
    assert Cin == 3, "residual x + ToRGB(y) requires in_channels == 3"
    Cmid = params["conv1_w"].shape[0]
    P = H * W

    # NCHW -> (B, C, H*W): a *free* reshape, no HBM transpose.
    x = x_nchw.reshape(B, Cin, P).astype(jnp.float32)

    # per-batch modulation scales (EqualLinear) and demod coefficients (glue)
    s1 = _modulation(style, params["mod1_w"], params["mod1_b"])      # (B, Cin)
    s2 = _modulation(style, params["mod2_w"], params["mod2_b"])      # (B, Cmid)
    s3 = _modulation(style, params["mod3_w"], params["mod3_b"])      # (B, Cmid)

    w1 = params["conv1_w"] / math.sqrt(Cin * 9)                      # (Cmid, Cin, 3, 3)
    w2 = params["conv2_w"] / math.sqrt(Cmid * 9)                     # (Cmid, Cmid, 3, 3)
    w3 = params["conv3_w"][:, :, 0, 0] / math.sqrt(Cmid)             # (3, Cmid)

    d1 = jax.lax.rsqrt(jnp.einsum("oikl,bi->bo", w1 * w1, s1 * s1) + 1e-8)
    d2 = jax.lax.rsqrt(jnp.einsum("oikl,bi->bo", w2 * w2, s2 * s2) + 1e-8)

    Cp1 = _round8(Cin)
    Cp2 = _round8(Cmid)
    w1_k = _pack_conv_weight(w1, Cp1)                                # (Cmid, 9*Cp1)
    w2_k = _pack_conv_weight(w2, Cp2)                                # (Cmid, 9*Cp2)
    w3_k = w3                                                        # (3, Cmid)

    # Fold all per-batch vectors (+ broadcast biases) into ONE small input block.
    seg_sizes = [("s1", Cin), ("d1", Cmid), ("b1", Cmid), ("s2", Cmid),
                 ("d2", Cmid), ("b2", Cmid), ("s3", Cmid), ("b3", 3)]
    offs, cur = {}, 0
    for name, size in seg_sizes:
        offs[name] = cur
        cur += _round8(size)
    NV = cur

    segs = dict(s1=s1, d1=d1, b1=jnp.broadcast_to(params["act1_b"], (B, Cmid)),
                s2=s2, d2=d2, b2=jnp.broadcast_to(params["act2_b"], (B, Cmid)),
                s3=s3, b3=jnp.broadcast_to(params["rgb_b"], (B, 3)))
    vec = jnp.zeros((B, NV), jnp.float32)
    for name, size in seg_sizes:
        vec = vec.at[:, offs[name]:offs[name] + size].set(segs[name].astype(jnp.float32))
    vec = vec[:, :, None]                                            # (B, NV, 1)

    kernel = _make_refiner_kernel(H, W, Cin, Cmid, Cp1, Cp2, offs)
    PADLEN = P + 2 * W + 2

    out = pl.pallas_call(
        kernel,
        out_shape=jax.ShapeDtypeStruct((B, Cin, P), jnp.float32),
        grid=(B,),
        in_specs=[
            pl.BlockSpec((1, Cin, P), lambda b: (b, 0, 0)),          # x, channel-major
            pl.BlockSpec((1, NV, 1), lambda b: (b, 0, 0)),           # folded vectors
            pl.BlockSpec((Cmid, 9 * Cp1), lambda b: (0, 0)),         # w1 (tap-concat K)
            pl.BlockSpec((Cmid, 9 * Cp2), lambda b: (0, 0)),         # w2 (tap-concat K)
            pl.BlockSpec((3, Cmid), lambda b: (0, 0)),               # w3 (1x1 ToRGB)
        ],
        out_specs=pl.BlockSpec((1, Cin, P), lambda b: (b, 0, 0)),
        scratch_shapes=[pltpu.VMEM((Cp1, PADLEN), jnp.float32),
                        pltpu.VMEM((Cp2, PADLEN), jnp.float32)],
        compiler_params=pltpu.CompilerParams(dimension_semantics=("parallel",)),
    )(x, vec, w1_k, w2_k, w3_k)

    # (B, 3, H*W) -> NCHW: free reshape.
    return out.reshape(B, Cin, H, W)


def refiner_reference(x, style, params):
    """Pure-JAX reference of the PyTorch forward (NCHW)."""
    def modconv(inp, s, w_param, demodulate):
        B = inp.shape[0]
        O, I, k, _ = w_param.shape
        scale = 1.0 / math.sqrt(I * k * k)
        wmod = scale * w_param[None] * s[:, None, :, None, None]     # (B,O,I,k,k)
        if demodulate:
            d = jax.lax.rsqrt(jnp.sum(wmod * wmod, axis=(2, 3, 4)) + 1e-8)
            wmod = wmod * d[:, :, None, None, None]
        pad = k // 2
        outs = []
        for b in range(B):
            outs.append(jax.lax.conv_general_dilated(
                inp[b:b + 1], wmod[b], (1, 1), [(pad, pad), (pad, pad)],
                dimension_numbers=("NCHW", "OIHW", "NCHW"),
                precision=jax.lax.Precision.HIGHEST))
        return jnp.concatenate(outs, axis=0)

    def fused_lrelu(y, bias):
        y = y + bias[None, :, None, None]
        return jnp.where(y >= 0.0, y, LRELU_SLOPE * y) * SQRT2

    s1 = _modulation(style, params["mod1_w"], params["mod1_b"])
    s2 = _modulation(style, params["mod2_w"], params["mod2_b"])
    s3 = _modulation(style, params["mod3_w"], params["mod3_b"])

    y = fused_lrelu(modconv(x, s1, params["conv1_w"], True), params["act1_b"])
    y = fused_lrelu(modconv(y, s2, params["conv2_w"], True), params["act2_b"])
    y = modconv(y, s3, params["conv3_w"], False) + params["rgb_b"][None, :, None, None]
    return x + y


if __name__ == "__main__":
    B, in_ch, out_ch, style_dim, H, W = 2, 3, 8, 16, 16, 16

    key = jax.random.PRNGKey(0)
    k_p, k_x, k_s = jax.random.split(key, 3)
    params = init_params(k_p, in_ch, out_ch, style_dim)
    x = jax.random.normal(k_x, (B, in_ch, H, W), jnp.float32)
    style = jax.random.normal(k_s, (B, style_dim), jnp.float32)

    out = refiner_forward(x, style, params)
    out = jax.block_until_ready(out)

    ref = refiner_reference(x, style, params)
    err = float(jnp.max(jnp.abs(out - ref)))
    assert out.shape == x.shape, (out.shape, x.shape)
    assert err < 2e-2, f"max abs err {err}"
    print("KERNEL_OK")
</pallas_src>

<mosaic_0001>
module attributes {stable_mosaic.version = 11 : i64} {
  func.func @kernel(%arg0: i32, %arg1: memref<1x3x256xf32, #tpu.memory_space<vmem>>, %arg2: memref<1x64x1xf32, #tpu.memory_space<vmem>>, %arg3: memref<8x72xf32, #tpu.memory_space<vmem>>, %arg4: memref<8x72xf32, #tpu.memory_space<vmem>>, %arg5: memref<3x8xf32, #tpu.memory_space<vmem>>, %arg6: memref<1x3x256xf32, #tpu.memory_space<vmem>>, %arg7: memref<8x290xf32, #tpu.memory_space<vmem>>, %arg8: memref<8x290xf32, #tpu.memory_space<vmem>>) attributes {dimension_semantics = [#tpu.dimension_semantics<parallel>], iteration_bounds = array<i64: 2>, scalar_prefetch = 0 : i64, scratch_operands = 2 : i64, tpu.core_type = #tpu.core_type<tc>, window_params = [{transform_indices = @transform_0, window_bounds = array<i64: 1, 3, 256>}, {transform_indices = @transform_1, window_bounds = array<i64: 1, 64, 1>}, {pipeline_mode = #tpu.pipeline_mode<synchronous>, transform_indices = @transform_2, window_bounds = array<i64: 8, 72>}, {pipeline_mode = #tpu.pipeline_mode<synchronous>, transform_indices = @transform_3, window_bounds = array<i64: 8, 72>}, {pipeline_mode = #tpu.pipeline_mode<synchronous>, transform_indices = @transform_4, window_bounds = array<i64: 3, 8>}, {transform_indices = @transform_5, window_bounds = array<i64: 1, 3, 256>}]} {
    %0 = tpu.iota {dimensions = array<i32: 1>} : vector<1x256xi32>
    %c16_i32 = arith.constant 16 : i32
    %c0_i32 = arith.constant 0 : i32
    %1 = arith.cmpi eq, %c16_i32, %c0_i32 : i32
    %c1_i32 = arith.constant 1 : i32
    %2 = arith.select %1, %c1_i32, %c16_i32 : i32
    %3 = vector.broadcast %2 : i32 to vector<1x256xi32>
    %4 = arith.remsi %0, %3 : vector<1x256xi32>
    %c0_i32_0 = arith.constant 0 : i32
    %5 = vector.broadcast %c0_i32_0 : i32 to vector<1x256xi32>
    %6 = arith.cmpi ne, %4, %5 : vector<1x256xi32>
    %c0_i32_1 = arith.constant 0 : i32
    %7 = vector.broadcast %c0_i32_1 : i32 to vector<1x256xi32>
    %8 = arith.cmpi slt, %4, %7 : vector<1x256xi32>
    %c0_i32_2 = arith.constant 0 : i32
    %9 = arith.cmpi slt, %2, %c0_i32_2 : i32
    %10 = vector.broadcast %9 : i1 to vector<1x256xi1>
    %11 = vector.broadcast %10 : vector<1x256xi1> to vector<1x256xi1>
    %12 = arith.xori %8, %11 : vector<1x256xi1>
    %13 = arith.andi %12, %6 : vector<1x256xi1>
    %14 = vector.broadcast %2 : i32 to vector<1x256xi32>
    %15 = arith.addi %4, %14 : vector<1x256xi32>
    %16 = arith.select %13, %15, %4 : vector<1x256xi1>, vector<1x256xi32>
    %c0_i32_3 = arith.constant 0 : i32
    %17 = vector.broadcast %c0_i32_3 : i32 to vector<1x256xi32>
    %18 = arith.cmpi eq, %16, %17 : vector<1x256xi32>
    %c15_i32 = arith.constant 15 : i32
    %19 = vector.broadcast %c15_i32 : i32 to vector<1x256xi32>
    %20 = arith.cmpi eq, %16, %19 : vector<1x256xi32>
    %c0 = arith.constant 0 : index
    %c0_4 = arith.constant 0 : index
    %c0_5 = arith.constant 0 : index
    %21 = vector.load %arg2[%c0, %c0_4, %c0_5] : memref<1x64x1xf32, #tpu.memory_space<vmem>>, vector<1x64x1xf32>
    %22 = vector.shape_cast %21 : vector<1x64x1xf32> to vector<64x1xf32>
    %23 = vector.extract_strided_slice %22 {offsets = [0, 0], sizes = [3, 1], strides = [1, 1]} : vector<64x1xf32> to vector<3x1xf32>
    %24 = vector.extract_strided_slice %22 {offsets = [8, 0], sizes = [8, 1], strides = [1, 1]} : vector<64x1xf32> to vector<8x1xf32>
    %25 = vector.extract_strided_slice %22 {offsets = [16, 0], sizes = [8, 1], strides = [1, 1]} : vector<64x1xf32> to vector<8x1xf32>
    %26 = vector.extract_strided_slice %22 {offsets = [24, 0], sizes = [8, 1], strides = [1, 1]} : vector<64x1xf32> to vector<8x1xf32>
    %27 = vector.extract_strided_slice %22 {offsets = [32, 0], sizes = [8, 1], strides = [1, 1]} : vector<64x1xf32> to vector<8x1xf32>
    %28 = vector.extract_strided_slice %22 {offsets = [40, 0], sizes = [8, 1], strides = [1, 1]} : vector<64x1xf32> to vector<8x1xf32>
    %29 = vector.extract_strided_slice %22 {offsets = [48, 0], sizes = [8, 1], strides = [1, 1]} : vector<64x1xf32> to vector<8x1xf32>
    %30 = vector.extract_strided_slice %22 {offsets = [56, 0], sizes = [3, 1], strides = [1, 1]} : vector<64x1xf32> to vector<3x1xf32>
    %c0_6 = arith.constant 0 : index
    %c0_7 = arith.constant 0 : index
    %c0_8 = arith.constant 0 : index
    %31 = vector.load %arg1[%c0_6, %c0_7, %c0_8] : memref<1x3x256xf32, #tpu.memory_space<vmem>>, vector<1x3x256xf32>
    %32 = vector.shape_cast %31 : vector<1x3x256xf32> to vector<3x256xf32>
    %33 = vector.broadcast %23 : vector<3x1xf32> to vector<3x256xf32>
    %34 = arith.mulf %32, %33 : vector<3x256xf32>
    %cst = arith.constant 0.000000e+00 : f32
    %35 = vector.broadcast %cst : f32 to vector<8x17xf32>
    %c0_9 = arith.constant 0 : index
    %c0_10 = arith.constant 0 : index
    %36 = vector.load %arg7[%c0_9, %c0_10] : memref<8x290xf32, #tpu.memory_space<vmem>>, vector<8x17xf32>
    tpu.vector_store %arg7[%c0_9, %c0_10], %35 {strides = array<i32>} : memref<8x290xf32, #tpu.memory_space<vmem>>, vector<8x17xf32>,
    %c0_11 = arith.constant 0 : index
    %c273 = arith.constant 273 : index
    %37 = vector.load %arg7[%c0_11, %c273] : memref<8x290xf32, #tpu.memory_space<vmem>>, vector<8x17xf32>
    tpu.vector_store %arg7[%c0_11, %c273], %35 {strides = array<i32>} : memref<8x290xf32, #tpu.memory_space<vmem>>, vector<8x17xf32>,
    %cst_12 = arith.constant 0.000000e+00 : f32
    %38 = vector.broadcast %cst_12 : f32 to vector<5x256xf32>
    %c3 = arith.constant 3 : index
    %c17 = arith.constant 17 : index
    %39 = vector.load %arg7[%c3, %c17] : memref<8x290xf32, #tpu.memory_space<vmem>>, vector<5x256xf32>
    tpu.vector_store %arg7[%c3, %c17], %38 {strides = array<i32>} : memref<8x290xf32, #tpu.memory_space<vmem>>, vector<5x256xf32>,
    %c0_13 = arith.constant 0 : index
    %c17_14 = arith.constant 17 : index
    %40 = vector.load %arg7[%c0_13, %c17_14] : memref<8x290xf32, #tpu.memory_space<vmem>>, vector<3x256xf32>
    tpu.vector_store %arg7[%c0_13, %c17_14], %34 {strides = array<i32>} : memref<8x290xf32, #tpu.memory_space<vmem>>, vector<3x256xf32>,
    %c0_15 = arith.constant 0 : index
    %c0_16 = arith.constant 0 : index
    %41 = vector.load %arg3[%c0_15, %c0_16] : memref<8x72xf32, #tpu.memory_space<vmem>>, vector<8x72xf32>
    %c0_17 = arith.constant 0 : index
    %c0_18 = arith.constant 0 : index
    %42 = vector.load %arg7[%c0_17, %c0_18] : memref<8x290xf32, #tpu.memory_space<vmem>>, vector<8x256xf32>
    %cst_19 = arith.constant 0.000000e+00 : f32
    %43 = vector.shape_cast %18 : vector<1x256xi1> to vector<1x256xi1>
    %44 = vector.broadcast %43 : vector<1x256xi1> to vector<8x256xi1>
    %45 = vector.broadcast %cst_19 : f32 to vector<8x256xf32>
    %46 = arith.select %44, %45, %42 : vector<8x256xi1>, vector<8x256xf32>
    %c0_20 = arith.constant 0 : index
    %c1 = arith.constant 1 : index
    %47 = vector.load %arg7[%c0_20, %c1] : memref<8x290xf32, #tpu.memory_space<vmem>>, vector<8x256xf32>
    %c0_21 = arith.constant 0 : index
    %c2 = arith.constant 2 : index
    %48 = vector.load %arg7[%c0_21, %c2] : memref<8x290xf32, #tpu.memory_space<vmem>>, vector<8x256xf32>
    %cst_22 = arith.constant 0.000000e+00 : f32
    %49 = vector.shape_cast %20 : vector<1x256xi1> to vector<1x256xi1>
    %50 = vector.broadcast %49 : vector<1x256xi1> to vector<8x256xi1>
    %51 = vector.broadcast %cst_22 : f32 to vector<8x256xf32>
    %52 = arith.select %50, %51, %48 : vector<8x256xi1>, vector<8x256xf32>
    %c0_23 = arith.constant 0 : index
    %c16 = arith.constant 16 : index
    %53 = vector.load %arg7[%c0_23, %c16] : memref<8x290xf32, #tpu.memory_space<vmem>>, vector<8x256xf32>
    %cst_24 = arith.constant 0.000000e+00 : f32
    %54 = vector.shape_cast %18 : vector<1x256xi1> to vector<1x256xi1>
    %55 = vector.broadcast %54 : vector<1x256xi1> to vector<8x256xi1>
    %56 = vector.broadcast %cst_24 : f32 to vector<8x256xf32>
    %57 = arith.select %55, %56, %53 : vector<8x256xi1>, vector<8x256xf32>
    %c0_25 = arith.constant 0 : index
    %c17_26 = arith.constant 17 : index
    %58 = vector.load %arg7[%c0_25, %c17_26] : memref<8x290xf32, #tpu.memory_space<vmem>>, vector<8x256xf32>
    %c0_27 = arith.constant 0 : index
    %c18 = arith.constant 18 : index
    %59 = vector.load %arg7[%c0_27, %c18] : memref<8x290xf32, #tpu.memory_space<vmem>>, vector<8x256xf32>
    %cst_28 = arith.constant 0.000000e+00 : f32
    %60 = vector.shape_cast %20 : vector<1x256xi1> to vector<1x256xi1>
    %61 = vector.broadcast %60 : vector<1x256xi1> to vector<8x256xi1>
    %62 = vector.broadcast %cst_28 : f32 to vector<8x256xf32>
    %63 = arith.select %61, %62, %59 : vector<8x256xi1>, vector<8x256xf32>
    %c0_29 = arith.constant 0 : index
    %c32 = arith.constant 32 : index
    %64 = vector.load %arg7[%c0_29, %c32] : memref<8x290xf32, #tpu.memory_space<vmem>>, vector<8x256xf32>
    %cst_30 = arith.constant 0.000000e+00 : f32
    %65 = vector.shape_cast %18 : vector<1x256xi1> to vector<1x256xi1>
    %66 = vector.broadcast %65 : vector<1x256xi1> to vector<8x256xi1>
    %67 = vector.broadcast %cst_30 : f32 to vector<8x256xf32>
    %68 = arith.select %66, %67, %64 : vector<8x256xi1>, vector<8x256xf32>
    %c0_31 = arith.constant 0 : index
    %c33 = arith.constant 33 : index
    %69 = vector.load %arg7[%c0_31, %c33] : memref<8x290xf32, #tpu.memory_space<vmem>>, vector<8x256xf32>
    %c0_32 = arith.constant 0 : index
    %c34 = arith.constant 34 : index
    %70 = vector.load %arg7[%c0_32, %c34] : memref<8x290xf32, #tpu.memory_space<vmem>>, vector<8x256xf32>
    %cst_33 = arith.constant 0.000000e+00 : f32
    %71 = vector.shape_cast %20 : vector<1x256xi1> to vector<1x256xi1>
    %72 = vector.broadcast %71 : vector<1x256xi1> to vector<8x256xi1>
    %73 = vector.broadcast %cst_33 : f32 to vector<8x256xf32>
    %74 = arith.select %72, %73, %70 : vector<8x256xi1>, vector<8x256xf32>
    %75 = tpu.concatenate %46, %47, %52, %57, %58, %63, %68, %69, %74 in 0 : vector<8x256xf32>, vector<8x256xf32>, vector<8x256xf32>, vector<8x256xf32>, vector<8x256xf32>, vector<8x256xf32>, vector<8x256xf32>, vector<8x256xf32>, vector<8x256xf32> -> vector<72x256xf32>
    %cst_34 = arith.constant dense<0.000000e+00> : vector<8x256xf32>
    %76 = tpu.matmul %41, %75, %cst_34 {dimension_numbers = #tpu.dot_dimension_numbers<[1], [0], [0], [1], [0, 0, 1, 1], [], []>} : vector<8x72xf32>, vector<72x256xf32>, vector<8x256xf32> -> vector<8x256xf32>
    %77 = vector.broadcast %24 : vector<8x1xf32> to vector<8x256xf32>
    %78 = arith.mulf %76, %77 : vector<8x256xf32>
    %79 = vector.broadcast %25 : vector<8x1xf32> to vector<8x256xf32>
    %80 = arith.addf %78, %79 : vector<8x256xf32>
    %cst_35 = arith.constant 0.000000e+00 : f32
    %81 = vector.broadcast %cst_35 : f32 to vector<8x256xf32>
    %82 = arith.cmpf oge, %80, %81 : vector<8x256xf32>
    %cst_36 = arith.constant 2.000000e-01 : f32
    %83 = vector.broadcast %cst_36 : f32 to vector<8x256xf32>
    %84 = arith.mulf %83, %80 : vector<8x256xf32>
    %85 = arith.select %82, %80, %84 : vector<8x256xi1>, vector<8x256xf32>
    %cst_37 = arith.constant 1.41421354 : f32
    %86 = vector.broadcast %cst_37 : f32 to vector<8x256xf32>
    %87 = arith.mulf %85, %86 : vector<8x256xf32>
    %88 = vector.broadcast %26 : vector<8x1xf32> to vector<8x256xf32>
    %89 = arith.mulf %87, %88 : vector<8x256xf32>
    %cst_38 = arith.constant 0.000000e+00 : f32
    %90 = vector.broadcast %cst_38 : f32 to vector<8x17xf32>
    %c0_39 = arith.constant 0 : index
    %c0_40 = arith.constant 0 : index
    %91 = vector.load %arg8[%c0_39, %c0_40] : memref<8x290xf32, #tpu.memory_space<vmem>>, vector<8x17xf32>
    tpu.vector_store %arg8[%c0_39, %c0_40], %90 {strides = array<i32>} : memref<8x290xf32, #tpu.memory_space<vmem>>, vector<8x17xf32>,
    %c0_41 = arith.constant 0 : index
    %c273_42 = arith.constant 273 : index
    %92 = vector.load %arg8[%c0_41, %c273_42] : memref<8x290xf32, #tpu.memory_space<vmem>>, vector<8x17xf32>
    tpu.vector_store %arg8[%c0_41, %c273_42], %90 {strides = array<i32>} : memref<8x290xf32, #tpu.memory_space<vmem>>, vector<8x17xf32>,
    %c0_43 = arith.constant 0 : index
    %c17_44 = arith.constant 17 : index
    %93 = vector.load %arg8[%c0_43, %c17_44] : memref<8x290xf32, #tpu.memory_space<vmem>>, vector<8x256xf32>
    tpu.vector_store %arg8[%c0_43, %c17_44], %89 {strides = array<i32>} : memref<8x290xf32, #tpu.memory_space<vmem>>, vector<8x256xf32>,
    %c0_45 = arith.constant 0 : index
    %c0_46 = arith.constant 0 : index
    %94 = vector.load %arg4[%c0_45, %c0_46] : memref<8x72xf32, #tpu.memory_space<vmem>>, vector<8x72xf32>
    %c0_47 = arith.constant 0 : index
    %c0_48 = arith.constant 0 : index
    %95 = vector.load %arg8[%c0_47, %c0_48] : memref<8x290xf32, #tpu.memory_space<vmem>>, vector<8x256xf32>
    %cst_49 = arith.constant 0.000000e+00 : f32
    %96 = vector.shape_cast %18 : vector<1x256xi1> to vector<1x256xi1>
    %97 = vector.broadcast %96 : vector<1x256xi1> to vector<8x256xi1>
    %98 = vector.broadcast %cst_49 : f32 to vector<8x256xf32>
    %99 = arith.select %97, %98, %95 : vector<8x256xi1>, vector<8x256xf32>
    %c0_50 = arith.constant 0 : index
    %c1_51 = arith.constant 1 : index
    %100 = vector.load %arg8[%c0_50, %c1_51] : memref<8x290xf32, #tpu.memory_space<vmem>>, vector<8x256xf32>
    %c0_52 = arith.constant 0 : index
    %c2_53 = arith.constant 2 : index
    %101 = vector.load %arg8[%c0_52, %c2_53] : memref<8x290xf32, #tpu.memory_space<vmem>>, vector<8x256xf32>
    %cst_54 = arith.constant 0.000000e+00 : f32
    %102 = vector.shape_cast %20 : vector<1x256xi1> to vector<1x256xi1>
    %103 = vector.broadcast %102 : vector<1x256xi1> to vector<8x256xi1>
    %104 = vector.broadcast %cst_54 : f32 to vector<8x256xf32>
    %105 = arith.select %103, %104, %101 : vector<8x256xi1>, vector<8x256xf32>
    %c0_55 = arith.constant 0 : index
    %c16_56 = arith.constant 16 : index
    %106 = vector.load %arg8[%c0_55, %c16_56] : memref<8x290xf32, #tpu.memory_space<vmem>>, vector<8x256xf32>
    %cst_57 = arith.constant 0.000000e+00 : f32
    %107 = vector.shape_cast %18 : vector<1x256xi1> to vector<1x256xi1>
    %108 = vector.broadcast %107 : vector<1x256xi1> to vector<8x256xi1>
    %109 = vector.broadcast %cst_57 : f32 to vector<8x256xf32>
    %110 = arith.select %108, %109, %106 : vector<8x256xi1>, vector<8x256xf32>
    %c0_58 = arith.constant 0 : index
    %c17_59 = arith.constant 17 : index
    %111 = vector.load %arg8[%c0_58, %c17_59] : memref<8x290xf32, #tpu.memory_space<vmem>>, vector<8x256xf32>
    %c0_60 = arith.constant 0 : index
    %c18_61 = arith.constant 18 : index
    %112 = vector.load %arg8[%c0_60, %c18_61] : memref<8x290xf32, #tpu.memory_space<vmem>>, vector<8x256xf32>
    %cst_62 = arith.constant 0.000000e+00 : f32
    %113 = vector.shape_cast %20 : vector<1x256xi1> to vector<1x256xi1>
    %114 = vector.broadcast %113 : vector<1x256xi1> to vector<8x256xi1>
    %115 = vector.broadcast %cst_62 : f32 to vector<8x256xf32>
    %116 = arith.select %114, %115, %112 : vector<8x256xi1>, vector<8x256xf32>
    %c0_63 = arith.constant 0 : index
    %c32_64 = arith.constant 32 : index
    %117 = vector.load %arg8[%c0_63, %c32_64] : memref<8x290xf32, #tpu.memory_space<vmem>>, vector<8x256xf32>
    %cst_65 = arith.constant 0.000000e+00 : f32
    %118 = vector.shape_cast %18 : vector<1x256xi1> to vector<1x256xi1>
    %119 = vector.broadcast %118 : vector<1x256xi1> to vector<8x256xi1>
    %120 = vector.broadcast %cst_65 : f32 to vector<8x256xf32>
    %121 = arith.select %119, %120, %117 : vector<8x256xi1>, vector<8x256xf32>
    %c0_66 = arith.constant 0 : index
    %c33_67 = arith.constant 33 : index
    %122 = vector.load %arg8[%c0_66, %c33_67] : memref<8x290xf32, #tpu.memory_space<vmem>>, vector<8x256xf32>
    %c0_68 = arith.constant 0 : index
    %c34_69 = arith.constant 34 : index
    %123 = vector.load %arg8[%c0_68, %c34_69] : memref<8x290xf32, #tpu.memory_space<vmem>>, vector<8x256xf32>
    %cst_70 = arith.constant 0.000000e+00 : f32
    %124 = vector.shape_cast %20 : vector<1x256xi1> to vector<1x256xi1>
    %125 = vector.broadcast %124 : vector<1x256xi1> to vector<8x256xi1>
    %126 = vector.broadcast %cst_70 : f32 to vector<8x256xf32>
    %127 = arith.select %125, %126, %123 : vector<8x256xi1>, vector<8x256xf32>
    %128 = tpu.concatenate %99, %100, %105, %110, %111, %116, %121, %122, %127 in 0 : vector<8x256xf32>, vector<8x256xf32>, vector<8x256xf32>, vector<8x256xf32>, vector<8x256xf32>, vector<8x256xf32>, vector<8x256xf32>, vector<8x256xf32>, vector<8x256xf32> -> vector<72x256xf32>
    %cst_71 = arith.constant dense<0.000000e+00> : vector<8x256xf32>
    %129 = tpu.matmul %94, %128, %cst_71 {dimension_numbers = #tpu.dot_dimension_numbers<[1], [0], [0], [1], [0, 0, 1, 1], [], []>} : vector<8x72xf32>, vector<72x256xf32>, vector<8x256xf32> -> vector<8x256xf32>
    %130 = vector.broadcast %27 : vector<8x1xf32> to vector<8x256xf32>
    %131 = arith.mulf %129, %130 : vector<8x256xf32>
    %132 = vector.broadcast %28 : vector<8x1xf32> to vector<8x256xf32>
    %133 = arith.addf %131, %132 : vector<8x256xf32>
    %cst_72 = arith.constant 0.000000e+00 : f32
    %134 = vector.broadcast %cst_72 : f32 to vector<8x256xf32>
    %135 = arith.cmpf oge, %133, %134 : vector<8x256xf32>
    %cst_73 = arith.constant 2.000000e-01 : f32
    %136 = vector.broadcast %cst_73 : f32 to vector<8x256xf32>
    %137 = arith.mulf %136, %133 : vector<8x256xf32>
    %138 = arith.select %135, %133, %137 : vector<8x256xi1>, vector<8x256xf32>
    %cst_74 = arith.constant 1.41421354 : f32
    %139 = vector.broadcast %cst_74 : f32 to vector<8x256xf32>
    %140 = arith.mulf %138, %139 : vector<8x256xf32>
    %c0_75 = arith.constant 0 : index
    %c0_76 = arith.constant 0 : index
    %141 = vector.load %arg5[%c0_75, %c0_76] : memref<3x8xf32, #tpu.memory_space<vmem>>, vector<3x8xf32>
    %142 = vector.broadcast %29 : vector<8x1xf32> to vector<8x256xf32>
    %143 = arith.mulf %140, %142 : vector<8x256xf32>
    %cst_77 = arith.constant dense<0.000000e+00> : vector<3x256xf32>
    %144 = tpu.matmul %141, %143, %cst_77 {dimension_numbers = #tpu.dot_dimension_numbers<[1], [0], [0], [1], [0, 0, 1, 1], [], []>} : vector<3x8xf32>, vector<8x256xf32>, vector<3x256xf32> -> vector<3x256xf32>
    %145 = vector.broadcast %30 : vector<3x1xf32> to vector<3x256xf32>
    %146 = arith.addf %144, %145 : vector<3x256xf32>
    %c0_78 = arith.constant 0 : index
    %c0_79 = arith.constant 0 : index
    %c0_80 = arith.constant 0 : index
    %147 = vector.load %arg1[%c0_78, %c0_79, %c0_80] : memref<1x3x256xf32, #tpu.memory_space<vmem>>, vector<1x3x256xf32>
    %148 = vector.shape_cast %147 : vector<1x3x256xf32> to vector<3x256xf32>
    %149 = arith.addf %148, %146 : vector<3x256xf32>
    %c0_81 = arith.constant 0 : index
    %c0_82 = arith.constant 0 : index
    %c0_83 = arith.constant 0 : index
    %150 = vector.load %arg6[%c0_81, %c0_82, %c0_83] : memref<1x3x256xf32, #tpu.memory_space<vmem>>, vector<1x3x256xf32>
    %151 = vector.shape_cast %150 : vector<1x3x256xf32> to vector<3x256xf32>
    %152 = vector.shape_cast %149 : vector<3x256xf32> to vector<1x3x256xf32>
    tpu.vector_store %arg6[%c0_81, %c0_82, %c0_83], %152 {strides = array<i32>} : memref<1x3x256xf32, #tpu.memory_space<vmem>>, vector<1x3x256xf32>,
    return
  }
  func.func @transform_0(%arg0: i32) -> (i32, i32, i32) {
    %c0_i32 = arith.constant 0 : i32
    %c0_i32_0 = arith.constant 0 : i32
    %c0_i32_1 = arith.constant 0 : i32
    return %arg0, %c0_i32, %c0_i32_0 : i32, i32, i32
  }
  func.func @transform_1(%arg0: i32) -> (i32, i32, i32) {
    %c0_i32 = arith.constant 0 : i32
    %c0_i32_0 = arith.constant 0 : i32
    %c0_i32_1 = arith.constant 0 : i32
    return %arg0, %c0_i32, %c0_i32_0 : i32, i32, i32
  }
  func.func @transform_2(%arg0: i32) -> (i32, i32) {
    %c0_i32 = arith.constant 0 : i32
    %c0_i32_0 = arith.constant 0 : i32
    %c0_i32_1 = arith.constant 0 : i32
    return %c0_i32, %c0_i32_0 : i32, i32
  }
  func.func @transform_3(%arg0: i32) -> (i32, i32) {
    %c0_i32 = arith.constant 0 : i32
    %c0_i32_0 = arith.constant 0 : i32
    %c0_i32_1 = arith.constant 0 : i32
    return %c0_i32, %c0_i32_0 : i32, i32
  }
  func.func @transform_4(%arg0: i32) -> (i32, i32) {
    %c0_i32 = arith.constant 0 : i32
    %c0_i32_0 = arith.constant 0 : i32
    %c0_i32_1 = arith.constant 0 : i32
    return %c0_i32, %c0_i32_0 : i32, i32
  }
  func.func @transform_5(%arg0: i32) -> (i32, i32, i32) {
    %c0_i32 = arith.constant 0 : i32
    %c0_i32_0 = arith.constant 0 : i32
    %c0_i32_1 = arith.constant 0 : i32
    return %arg0, %c0_i32, %c0_i32_0 : i32, i32, i32
  }
}

</mosaic_0001>

<llo_original>
// kernel: tpu_custom_call.1
$region0: #{tpu_custom_call.1}
  #allocation0 [shape = 'u32[]', space=smem, size = 0x4, offset = 0x4, fixed_abs, tag = 'smem constant byte address 0x4 - core index']
  #allocation1 [shape = 'u32[72,128]{1,0:T(1,128)}', space=vmem, size = 0x9000, scoped, tag = 'internal scratch']
  #allocation2 [shape = 'f32[8,290]{1,0:T(8,128)}', space=vmem, size = 0x3000, scoped, tag = 'scratch operand']
  #allocation3 [shape = 'f32[8,290]{1,0:T(8,128)}', space=vmem, size = 0x3000, scoped, tag = 'scratch operand']
  %s0 = inlined_call_operand.vmem [shape: f32[2,3,256], index: 0, kind: input, shape index: {}]
  %s1 = inlined_call_operand.vmem [shape: f32[2,64,1], index: 1, kind: input, shape index: {}]
  %s2 = inlined_call_operand.vmem [shape: f32[8,72], index: 2, kind: input, shape index: {}]
  %s3 = inlined_call_operand.vmem [shape: f32[8,72], index: 3, kind: input, shape index: {}]
  %s4 = inlined_call_operand.vmem [shape: f32[3,8], index: 4, kind: input, shape index: {}]
  %s5 = inlined_call_operand.vmem [shape: f32[2,3,256], index: 5, kind: output, shape index: {}]
  %s6 = sld [smem:[#allocation0]]
  $region53: #{tpu_custom_call.1} parent=0
    _
  %s8 = ssub.s32 1, %s6
  %s9 = scalar_select 0, %s8, %s6
  loop: start=0, step=1, limit=4
  $region2: #{tpu_custom_call.1} parent=0 // loop_pre_header
    _
  $region3: #{tpu_custom_call.1} parent=0 // loop_header
    %s11 = sphi 0, %s15
    %p12 = scmp.ge.s32.totalorder %s11, 4
    %s21 = sphi 0, %s23
    %s24 = sphi 0, %s21
    %s25 = sphi 0, %s24
    %s41 = sphi 0, %s25
    %s47 = sphi 0, %s49
    %s50 = sphi 0, %s47
    %s51 = sphi 0, %s50
    %s67 = sphi 0, %s51
    %s71 = sphi 0, %s71
    %s73 = sphi 0, %s71
    %s74 = sphi 0, %s73
    %s88 = sphi 0, %s74
    %s92 = sphi 0, %s92
    %s94 = sphi 0, %s92
    %s95 = sphi 0, %s94
    %s109 = sphi 0, %s95
    %s113 = sphi 0, %s113
    %s115 = sphi 0, %s113
    %s116 = sphi 0, %s115
    %s130 = sphi 0, %s116
    %s136 = sphi 0, %s138
    %s139 = sphi 0, %s136
    %s140 = sphi 0, %s139
    %s156 = sphi 0, %s140
  $region4: #{tpu_custom_call.1} parent=0 // loop_header_branch
    %14 = sbr.rel (%p12) target = $region8
  $region5: #{tpu_custom_call.1} parent=0 // loop_body
    %s16 = ssub.s32 %s11, 1
    %s17 = ssub.s32 %s11, 2
    %s18 = sadd.s32 %s11, 1
    %s19 = ssub.s32 %s11, %s18
    %p20 = scmp.eq.s32.totalorder %s19, 0
    %s22 = sadd.s32 %s21, 1
    %s23 = scalar_select %p20, %s21, %s22
    %p26 = pneg %p20
    %p27 = scmp.eq.s32.totalorder %s11, 1
    %p28 = por %p26, %p27
    %p29 = scmp.ne.s32.totalorder %s21, %s24
    %p30 = scmp.eq.s32.totalorder %s11, 0
    %p31 = por %p29, %p30
    %p32 = scmp.ne.s32.totalorder %s21, %s24
    %p33 = scmp.eq.s32.totalorder %s16, 1
    %p34 = por %p32, %p33
    %p35 = scmp.ne.s32.totalorder %s24, %s25
    %p36 = scmp.eq.s32.totalorder %s16, 0
    %p37 = por %p35, %p36
    %p38 = scmp.ne.s32.totalorder %s24, %s25
    %p39 = scmp.eq.s32.totalorder %s17, 1
    %p40 = por %p38, %p39
    %p42 = scmp.ne.s32.totalorder %s25, %s41
    %p43 = scmp.eq.s32.totalorder %s17, 0
    %p44 = por %p42, %p43
    %s45 = ssub.s32 %s11, %s18
    %p46 = scmp.eq.s32.totalorder %s45, 0
    %s48 = sadd.s32 %s47, 1
    %s49 = scalar_select %p46, %s47, %s48
    %p52 = pneg %p46
    %p53 = scmp.eq.s32.totalorder %s11, 1
    %p54 = por %p52, %p53
    %p55 = scmp.ne.s32.totalorder %s47, %s50
    %p56 = scmp.eq.s32.totalorder %s11, 0
    %p57 = por %p55, %p56
    %p58 = scmp.ne.s32.totalorder %s47, %s50
    %p59 = scmp.eq.s32.totalorder %s16, 1
    %p60 = por %p58, %p59
    %p61 = scmp.ne.s32.totalorder %s50, %s51
    %p62 = scmp.eq.s32.totalorder %s16, 0
    %p63 = por %p61, %p62
    %p64 = scmp.ne.s32.totalorder %s50, %s51
    %p65 = scmp.eq.s32.totalorder %s17, 1
    %p66 = por %p64, %p65
    %p68 = scmp.ne.s32.totalorder %s51, %s67
    %p69 = scmp.eq.s32.totalorder %s17, 0
    %p70 = por %p68, %p69
    %s72 = sadd.s32 %s71, 1
    %p75 = scmp.eq.s32.totalorder %s11, 1
    %p76 = scmp.ne.s32.totalorder %s71, %s73
    %p77 = scmp.eq.s32.totalorder %s11, 0
    %p78 = por %p76, %p77
    %p79 = scmp.ne.s32.totalorder %s71, %s73
    %p80 = scmp.eq.s32.totalorder %s16, 1
    %p81 = por %p79, %p80
    %p82 = scmp.ne.s32.totalorder %s73, %s74
    %p83 = scmp.eq.s32.totalorder %s16, 0
    %p84 = por %p82, %p83
    %p85 = scmp.ne.s32.totalorder %s73, %s74
    %p86 = scmp.eq.s32.totalorder %s17, 1
    %p87 = por %p85, %p86
    %p89 = scmp.ne.s32.totalorder %s74, %s88
    %p90 = scmp.eq.s32.totalorder %s17, 0
    %p91 = por %p89, %p90
    %s93 = sadd.s32 %s92, 1
    %p96 = scmp.eq.s32.totalorder %s11, 1
    %p97 = scmp.ne.s32.totalorder %s92, %s94
    %p98 = scmp.eq.s32.totalorder %s11, 0
    %p99 = por %p97, %p98
    %p100 = scmp.ne.s32.totalorder %s92, %s94
    %p101 = scmp.eq.s32.totalorder %s16, 1
    %p102 = por %p100, %p101
    %p103 = scmp.ne.s32.totalorder %s94, %s95
    %p104 = scmp.eq.s32.totalorder %s16, 0
    %p105 = por %p103, %p104
    %p106 = scmp.ne.s32.totalorder %s94, %s95
    %p107 = scmp.eq.s32.totalorder %s17, 1
    %p108 = por %p106, %p107
    %p110 = scmp.ne.s32.totalorder %s95, %s109
    %p111 = scmp.eq.s32.totalorder %s17, 0
    %p112 = por %p110, %p111
    %s114 = sadd.s32 %s113, 1
    %p117 = scmp.eq.s32.totalorder %s11, 1
    %p118 = scmp.ne.s32.totalorder %s113, %s115
    %p119 = scmp.eq.s32.totalorder %s11, 0
    %p120 = por %p118, %p119
    %p121 = scmp.ne.s32.totalorder %s113, %s115
    %p122 = scmp.eq.s32.totalorder %s16, 1
    %p123 = por %p121, %p122
    %p124 = scmp.ne.s32.totalorder %s115, %s116
    %p125 = scmp.eq.s32.totalorder %s16, 0
    %p126 = por %p124, %p125
    %p127 = scmp.ne.s32.totalorder %s115, %s116
    %p128 = scmp.eq.s32.totalorder %s17, 1
    %p129 = por %p127, %p128
    %p131 = scmp.ne.s32.totalorder %s116, %s130
    %p132 = scmp.eq.s32.totalorder %s17, 0
    %p133 = por %p131, %p132
    %s134 = ssub.s32 %s11, %s18
    %p135 = scmp.eq.s32.totalorder %s134, 0
    %s137 = sadd.s32 %s136, 1
    %s138 = scalar_select %p135, %s136, %s137
    %p141 = pneg %p135
    %p142 = scmp.eq.s32.totalorder %s11, 1
    %p143 = por %p141, %p142
    %p144 = scmp.ne.s32.totalorder %s136, %s139
    %p145 = scmp.eq.s32.totalorder %s11, 0
    %p146 = por %p144, %p145
    %p147 = scmp.ne.s32.totalorder %s136, %s139
    %p148 = scmp.eq.s32.totalorder %s16, 1
    %p149 = por %p147, %p148
    %p150 = scmp.ne.s32.totalorder %s139, %s140
    %p151 = scmp.eq.s32.totalorder %s16, 0
    %p152 = por %p150, %p151
    %p153 = scmp.ne.s32.totalorder %s139, %s140
    %p154 = scmp.eq.s32.totalorder %s17, 1
    %p155 = por %p153, %p154
    %p157 = scmp.ne.s32.totalorder %s140, %s156
    %p158 = scmp.eq.s32.totalorder %s17, 0
    %p159 = por %p157, %p158
    %p160 = scmp.le.s32.totalorder 1, %s11
    %p161 = scmp.lt.s32.totalorder %s11, 3
    %p162 = pnand %p160, %p161
    %p163 = pneg %p162
    // Predicated region
    $region9: #{tpu_custom_call.1} parent=5 // pred_check
      _
    $region10: #{tpu_custom_call.1} parent=5 // pred_check_branch
      %165 = sbr.rel (%p162) target = $region12
    $region11: #{tpu_custom_call.1} parent=5 // pred_region
      %s166 = ssub.s32 %s11, 1
      // Predicated region
      $region13: #{tpu_custom_call.1} parent=11 // pred_check
        %p167 = pneg %p84
      $region14: #{tpu_custom_call.1} parent=11 // pred_check_branch
        %169 = sbr.rel (%p167) target = $region16
      $region15: #{tpu_custom_call.1} parent=11 // pred_region
        _
      $region16: #{tpu_custom_call.1} parent=11 // pred_fallthru
        _
      // Predicated region
      $region17: #{tpu_custom_call.1} parent=11 // pred_check
        %p170 = pneg %p105
      $region18: #{tpu_custom_call.1} parent=11 // pred_check_branch
        %172 = sbr.rel (%p170) target = $region20
      $region19: #{tpu_custom_call.1} parent=11 // pred_region
        _
      $region20: #{tpu_custom_call.1} parent=11 // pred_fallthru
        _
      // Predicated region
      $region21: #{tpu_custom_call.1} parent=11 // pred_check
        %p173 = pneg %p126
      $region22: #{tpu_custom_call.1} parent=11 // pred_check_branch
        %175 = sbr.rel (%p173) target = $region24
      $region23: #{tpu_custom_call.1} parent=11 // pred_region
        _
      $region24: #{tpu_custom_call.1} parent=11 // pred_fallthru
        _
    $region12: #{tpu_custom_call.1} parent=5 // pred_fallthru
      _
    %p176 = scmp.lt.s32.totalorder %s11, 2
    // Predicated region
    $region25: #{tpu_custom_call.1} parent=5 // pred_check
      %p177 = pneg %p176
    $region26: #{tpu_custom_call.1} parent=5 // pred_check_branch
      %179 = sbr.rel (%p177) target = $region28
    $region27: #{tpu_custom_call.1} parent=5 // pred_region
      // Predicated region
      $region29: #{tpu_custom_call.1} parent=27 // pred_check
        %p180 = pneg %p31
      $region30: #{tpu_custom_call.1} parent=27 // pred_check_branch
        %182 = sbr.rel (%p180) target = $region32
      $region31: #{tpu_custom_call.1} parent=27 // pred_region
        %p183 = scmp.lt.s32.totalorder %s11, 1
        %s184 = scalar_select %p183, %s11, 1
        %s185 = smul.addr %s184, 2
        %s186 = smul.addr %s185, 4
        %s187 = scalar_lea.vmem %s0, %s186
      $region32: #{tpu_custom_call.1} parent=27 // pred_fallthru
        _
      // Predicated region
      $region33: #{tpu_custom_call.1} parent=27 // pred_check
        %p188 = pneg %p57
      $region34: #{tpu_custom_call.1} parent=27 // pred_check_branch
        %190 = sbr.rel (%p188) target = $region36
      $region35: #{tpu_custom_call.1} parent=27 // pred_region
        %p191 = scmp.lt.s32.totalorder %s11, 1
        %s192 = scalar_select %p191, %s11, 1
        %s193 = smul.addr %s192, 8
        %s194 = smul.addr %s193, 8
        %s195 = scalar_lea.vmem %s1, %s194
      $region36: #{tpu_custom_call.1} parent=27 // pred_fallthru
        _
    $region28: #{tpu_custom_call.1} parent=5 // pred_fallthru
      _
    %p196 = scmp.le.s32.totalorder 1, %s11
    %p197 = scmp.lt.s32.totalorder %s11, 3
    %p198 = pnand %p196, %p197
    %p199 = pneg %p198
    // Predicated region
    $region37: #{tpu_custom_call.1} parent=5 // pred_check
      _
    $region38: #{tpu_custom_call.1} parent=5 // pred_check_branch
      %201 = sbr.rel (%p198) target = $region40
    $region39: #{tpu_custom_call.1} parent=5 // pred_region
      %s202 = ssub.s32 %s11, 1
      %p203 = scmp.lt.s32.totalorder %s16, 1
      %s204 = scalar_select %p203, %s16, 1
      %s205 = smul.addr %s204, 2
      %s206 = smul.addr %s205, 4
      %s207 = scalar_lea.vmem %s0, %s206
      %p208 = pneg %p37
      %p209 = pneg %p34
      %p210 = scmp.lt.s32.totalorder %s16, 1
      %s211 = scalar_select %p210, %s16, 1
      %s212 = smul.addr %s211, 8
      %s213 = smul.addr %s212, 8
      %s214 = scalar_lea.vmem %s1, %s213
      %p215 = pneg %p63
      %p216 = pneg %p60
      %p217 = pneg %p84
      %p218 = pneg %p81
      %p219 = pneg %p105
      %p220 = pneg %p102
      %p221 = pneg %p126
      %p222 = pneg %p123
      %p223 = pneg %p152
      %p224 = pneg %p149
      %p225 = scmp.lt.s32.totalorder %s16, 1
      %s226 = scalar_select %p225, %s16, 1
      %s227 = smul.addr %s226, 2
      %s228 = smul.addr %s227, 4
      %s229 = scalar_lea.vmem %s5, %s228
      %p230 = scmp.lt.s32.totalorder %s16, 1
      %s231 = scalar_select %p230, %s16, 1
      %s232 = smul.addr %s231, 2
      %s233 = smul.addr %s232, 4
      %s234 = scalar_lea.vmem %s0, %s233
      %p235 = scmp.lt.s32.totalorder %s16, 1
      %s236 = scalar_select %p235, %s16, 1
      %s237 = smul.addr %s236, 8
      %s238 = smul.addr %s237, 8
      %s239 = scalar_lea.vmem %s1, %s238
      %p240 = scmp.lt.s32.totalorder %s16, 1
      %s241 = scalar_select %p240, %s16, 1
      %s242 = smul.addr %s241, 2
      %s243 = smul.addr %s242, 4
      %s244 = scalar_lea.vmem %s5, %s243
      %v245 = vlaneseq
      %v246 = vand.u32 %v245, 127
      %v247 = vadd.s32 %v246, 128
      %vm248 = vcmp.lt.s32.totalorder %v246, 0
      %v249 = vsub.s32 0, %v246
      %v250 = vsel %vm248, %v249, %v246
      %v251 = vshrl.u32 %v250, 4
      %v252 = vand.u32 %v250, 15
      %v253 = vsub.s32 0, %v252
      %v254 = vsel %vm248, %v253, %v252
      %vm255 = vcmp.lt.s32.totalorder %v247, 0
      %v256 = vsub.s32 0, %v247
      %v257 = vsel %vm255, %v256, %v247
      %v258 = vshrl.u32 %v257, 4
      %v259 = vand.u32 %v257, 15
      %v260 = vsub.s32 0, %v259
      %v261 = vsel %vm255, %v260, %v259
      %vm262 = vcmp.ne.s32.totalorder %v254, 0
      %vm263 = vcmp.ne.s32.totalorder %v261, 0
      %vm264 = vcmp.lt.s32.totalorder %v254, 0
      %vm265 = vcmp.lt.s32.totalorder %v261, 0
      %vm266 = vmand %vm264, %vm262
      %vm267 = vmand %vm265, %vm263
      %v268 = vadd.s32 %v254, 16
      %v269 = vadd.s32 %v261, 16
      %v270 = vsel %vm266, %v268, %v254
      %v271 = vsel %vm267, %v269, %v261
      %vm272 = vcmp.eq.s32.totalorder %v270, 0
      %vm273 = vcmp.eq.s32.totalorder %v271, 0
      %vm274 = vcmp.eq.s32.totalorder %v270, 15
      %vm275 = vcmp.eq.s32.totalorder %v271, 15
      %v276 = vld [vmem:[%s239] sm:$0xff]
      %v277 = vld [vmem:[%s239 + $0x8] sm:$0xff]
      %v278 = vld [vmem:[%s239 + $0x10] sm:$0xff]
      %v279 = vld [vmem:[%s239 + $0x18] sm:$0xff]
      %v280 = vld [vmem:[%s239 + $0x20] sm:$0xff]
      %v281 = vld [vmem:[%s239 + $0x28] sm:$0xff]
      %v282 = vld [vmem:[%s239 + $0x30] sm:$0xff]
      %v283 = vld [vmem:[%s239 + $0x38] sm:$0xff]
      %v284 = vld [vmem:[%s234] sm:$0x77]
      %286 = vset.pattern.permute.xlu0 0
      %287 = vperm.xlu0 %286, %v276
      %v288 = vpop.permute.xlu0 %287
      %v290 = vunpack.c.l.s4 839922192
      %v291 = vunpack.c.0.s8 %v290
      %v292 = vperm.slane %v288, %v291
      %v294 = vmul.f32 %v284, %v292
      %vm295 = vcmask 138240
      %296 = vst.msk [vmem:[#allocation2] sm:$0xff] %vm295, 0.0
      %vm297 = vcmask 277640
      %298 = vst.msk [vmem:[#allocation2 + $0x10] sm:$0xff] %vm297, 0.0
      %vm299 = vcmask 1047691
      %300 = vst.msk [vmem:[#allocation2] sm:$0xf8] %vm299, 0.0
      %301 = vst [vmem:[#allocation2 + $0x8] sm:$0xf8] 0.0
      %vm302 = vcmask 138243
      %303 = vst.msk [vmem:[#allocation2 + $0x10] sm:$0xf8] %vm302, 0.0
      %305 = vst [vmem:[#allocation1] ss:$2 sm:$0xff] %v294
      %v306 = vld.sshfl [vmem:[#allocation1] sm:$0xff pattern:$0x75316420]
      %v307 = vld.sshfl [vmem:[#allocation1 + $0x8] sm:$0xff pattern:$0x75316420]
      %308 = vrot.lane.b32.xlu0 %v306, 17
      %v309 = vpop.permute.xlu0 %308
      %310 = vrot.lane.b32.xlu0 %v307, 17
      %v311 = vpop.permute.xlu0 %310
      %v312 = vsel %vm295, %v309, %v311
      %vm316 = vcmask 1042568
      %317 = vst.msk [vmem:[#allocation2] sm:$0x7] %vm316, %v309
      %318 = vst [vmem:[#allocation2 + $0x8] sm:$0x7] %v312
      %vm319 = vcmask 133120
      %320 = vst.msk [vmem:[#allocation2 + $0x10] sm:$0x7] %vm319, %v311
      %v321 = vld [vmem:[%s2] sm:$0xff]
      %v322 = vld [vmem:[#allocation2] sm:$0xff]
      %v323 = vld [vmem:[#allocation2 + $0x8] sm:$0xff]
      %v324 = vsel %vm272, 1, 0
      %v325 = vsel %vm273, 1, 0
      %vm326 = vcmp.eq.s32.totalorder %v324, 1
      %vm327 = vcmp.eq.s32.totalorder %v325, 1
      %v328 = vsel %vm326, 0.0, %v322
      %v329 = vsel %vm327, 0.0, %v323
      %v330 = vld [vmem:[#allocation2 + $0x10] sm:$0xff]
      %v331 = vsel %vm274, 1, 0
      %v332 = vsel %vm275, 1, 0
      %vm333 = vcmp.eq.s32.totalorder %v331, 1
      %vm334 = vcmp.eq.s32.totalorder %v332, 1
      %338 = vrot.lane.b32.xlu0 %v322, 126
      %v339 = vpop.permute.xlu0 %338
      %340 = vrot.lane.b32.xlu0 %v323, 126
      %v341 = vpop.permute.xlu0 %340
      %342 = vrot.lane.b32.xlu0 %v330, 126
      %v343 = vpop.permute.xlu0 %342
      %vm344 = vcmask 1031168
      %v345 = vsel %vm344, %v339, %v341
      %v346 = vsel %vm344, %v341, %v343
      %v349 = vsel %vm333, 0.0, %v345
      %v350 = vsel %vm334, 0.0, %v346
      %351 = vrot.lane.b32.xlu0 %v322, 112
      %v352 = vpop.permute.xlu0 %351
      %353 = vrot.lane.b32.xlu0 %v323, 112
      %v354 = vpop.permute.xlu0 %353
      %355 = vrot.lane.b32.xlu0 %v330, 112
      %v356 = vpop.permute.xlu0 %355
      %vm357 = vcmask 916480
      %v358 = vsel %vm357, %v352, %v354
      %v359 = vsel %vm357, %v354, %v356
      %v362 = vsel %vm326, 0.0, %v358
      %v363 = vsel %vm327, 0.0, %v359
      %364 = vrot.lane.b32.xlu0 %v322, 110
      %v365 = vpop.permute.xlu0 %364
      %366 = vrot.lane.b32.xlu0 %v323, 110
      %v367 = vpop.permute.xlu0 %366
      %368 = vrot.lane.b32.xlu0 %v330, 110
      %v369 = vpop.permute.xlu0 %368
      %vm370 = vcmask 900096
      %v371 = vsel %vm370, %v365, %v367
      %v372 = vsel %vm370, %v367, %v369
      %v375 = vsel %vm333, 0.0, %v371
      %v376 = vsel %vm334, 0.0, %v372
      %377 = vrot.lane.b32.xlu0 %v322, 96
      %v378 = vpop.permute.xlu0 %377
      %379 = vrot.lane.b32.xlu0 %v323, 96
      %v380 = vpop.permute.xlu0 %379
      %381 = vrot.lane.b32.xlu0 %v330, 96
      %v382 = vpop.permute.xlu0 %381
      %vm383 = vcmask 785408
      %v384 = vsel %vm383, %v378, %v380
      %v385 = vsel %vm383, %v380, %v382
      %v388 = vsel %vm326, 0.0, %v384
      %v389 = vsel %vm327, 0.0, %v385
      %390 = vrot.lane.b32.xlu0 %v322, 94
      %v391 = vpop.permute.xlu0 %390
      %392 = vrot.lane.b32.xlu0 %v323, 94
      %v393 = vpop.permute.xlu0 %392
      %394 = vrot.lane.b32.xlu0 %v330, 94
      %v395 = vpop.permute.xlu0 %394
      %vm396 = vcmask 769024
      %v397 = vsel %vm396, %v391, %v393
      %v398 = vsel %vm396, %v393, %v395
      %v401 = vsel %vm333, 0.0, %v397
      %v402 = vsel %vm334, 0.0, %v398
      %403 = vrot.lane.b32.xlu0 %v322, 127
      %v404 = vpop.permute.xlu0 %403
      %405 = vrot.lane.b32.xlu0 %v323, 127
      %v406 = vpop.permute.xlu0 %405
      %407 = vrot.lane.b32.xlu0 %v330, 127
      %v408 = vpop.permute.xlu0 %407
      %vm409 = vcmask 1039360
      %v410 = vsel %vm409, %v404, %v406
      %v411 = vsel %vm409, %v406, %v408
      %414 = vrot.lane.b32.xlu0 %v322, 111
      %v415 = vpop.permute.xlu0 %414
      %416 = vrot.lane.b32.xlu0 %v323, 111
      %v417 = vpop.permute.xlu0 %416
      %418 = vrot.lane.b32.xlu0 %v330, 111
      %v419 = vpop.permute.xlu0 %418
      %vm420 = vcmask 908288
      %v421 = vsel %vm420, %v415, %v417
      %v422 = vsel %vm420, %v417, %v419
      %425 = vrot.lane.b32.xlu0 %v322, 95
      %v426 = vpop.permute.xlu0 %425
      %427 = vrot.lane.b32.xlu0 %v323, 95
      %v428 = vpop.permute.xlu0 %427
      %429 = vrot.lane.b32.xlu0 %v330, 95
      %v430 = vpop.permute.xlu0 %429
      %vm431 = vcmask 777216
      %v432 = vsel %vm431, %v426, %v428
      %v433 = vsel %vm431, %v428, %v430
      %vm436 = vcmask 588800
      %v438 = vsel %vm436, %v321, 0
      %440 = vmatpush.msra.mxu0 0.0
      %441 = vmatpush.msra.mxu0 0.0
      %442 = vmatpush.msra.mxu0 0.0
      %443 = vmatpush.msra.mxu0 0.0
      %444 = vmatpush.msra.mxu0 0.0
      %445 = vmatpush.msra.mxu0 0.0
      %446 = vmatpush.msra.mxu0 0.0
      %447 = vmatpush.msra.mxu0 %v401
      %448 = vmatpush.msra.mxu0 %v432
      %449 = vmatpush.msra.mxu0 %v388
      %450 = vmatpush.msra.mxu0 %v375
      %451 = vmatpush.msra.mxu0 %v421
      %452 = vmatpush.msra.mxu0 %v362
      %453 = vmatpush.msra.mxu0 %v349
      %454 = vmatpush.msra.mxu0 %v410
      %455 = vmatpush.msra.mxu0 %v328
      %456 = vmatmul.f32.gmra.mxu0 %v438
      %v457 = vpop.f32.mrf.mxu0
      %v458 = vadd.f32 0.0, %v457
      %459 = vdwg.mxu0
      %460 = vmatpush.msra.mxu0 0.0
      %461 = vmatpush.msra.mxu0 0.0
      %462 = vmatpush.msra.mxu0 0.0
      %463 = vmatpush.msra.mxu0 0.0
      %464 = vmatpush.msra.mxu0 0.0
      %465 = vmatpush.msra.mxu0 0.0
      %466 = vmatpush.msra.mxu0 0.0
      %467 = vmatpush.msra.mxu0 %v402
      %468 = vmatpush.msra.mxu0 %v433
      %469 = vmatpush.msra.mxu0 %v389
      %470 = vmatpush.msra.mxu0 %v376
      %471 = vmatpush.msra.mxu0 %v422
      %472 = vmatpush.msra.mxu0 %v363
      %473 = vmatpush.msra.mxu0 %v350
      %474 = vmatpush.msra.mxu0 %v411
      %475 = vmatpush.msra.mxu0 %v329
      %476 = vmatmul.f32.gmra.mxu0 %v438
      %v477 = vpop.f32.mrf.mxu0
      %v478 = vadd.f32 0.0, %v477
      %479 = vdwg.mxu0
      %481 = vset.pattern.permute.xlu0 0
      %482 = vperm.xlu0 %481, %v277
      %v483 = vpop.permute.xlu0 %482
      %v485 = vmul.f32 %v458, %v483
      %v486 = vmul.f32 %v478, %v483
      %488 = vset.pattern.permute.xlu0 0
      %489 = vperm.xlu0 %488, %v278
      %v490 = vpop.permute.xlu0 %489
      %v492 = vadd.f32 %v485, %v490
      %v493 = vadd.f32 %v486, %v490
      %vm494 = vcmp.ge.f32.partialorder %v492, 0.0
      %vm495 = vcmp.ge.f32.partialorder %v493, 0.0
      %v496 = vmul.f32 %v492, 0.2
      %v497 = vmul.f32 %v493, 0.2
      %v498 = vsel %vm494, %v492, %v496
      %v499 = vsel %vm495, %v493, %v497
      %v500 = vmul.f32 %v498, 1.4142135
      %v501 = vmul.f32 %v499, 1.4142135
      %503 = vset.pattern.permute.xlu0 0
      %504 = vperm.xlu0 %503, %v279
      %v505 = vpop.permute.xlu0 %504
      %v507 = vmul.f32 %v500, %v505
      %v508 = vmul.f32 %v501, %v505
      %509 = vst.msk [vmem:[#allocation3] sm:$0xff] %vm295, 0.0
      %510 = vst.msk [vmem:[#allocation3 + $0x10] sm:$0xff] %vm297, 0.0
      %513 = vrot.lane.b32.xlu0 %v507, 17
      %v514 = vpop.permute.xlu0 %513
      %515 = vrot.lane.b32.xlu0 %v508, 17
      %v516 = vpop.permute.xlu0 %515
      %v517 = vsel %vm295, %v514, %v516
      %vm521 = vcmask 1047688
      %522 = vst.msk [vmem:[#allocation3] sm:$0xff] %vm521, %v514
      %523 = vst [vmem:[#allocation3 + $0x8] sm:$0xff] %v517
      %524 = vst.msk [vmem:[#allocation3 + $0x10] sm:$0xff] %vm295, %v516
      %v525 = vld [vmem:[%s3] sm:$0xff]
      %v526 = vld [vmem:[#allocation3] sm:$0xff]
      %v527 = vld [vmem:[#allocation3 + $0x8] sm:$0xff]
      %v528 = vsel %vm326, 0.0, %v526
      %v529 = vsel %vm327, 0.0, %v527
      %v530 = vld [vmem:[#allocation3 + $0x10] sm:$0xff]
      %534 = vrot.lane.b32.xlu0 %v526, 126
      %v535 = vpop.permute.xlu0 %534
      %536 = vrot.lane.b32.xlu0 %v527, 126
      %v537 = vpop.permute.xlu0 %536
      %538 = vrot.lane.b32.xlu0 %v530, 126
      %v539 = vpop.permute.xlu0 %538
      %v540 = vsel %vm344, %v535, %v537
      %v541 = vsel %vm344, %v537, %v539
      %v544 = vsel %vm333, 0.0, %v540
      %v545 = vsel %vm334, 0.0, %v541
      %546 = vrot.lane.b32.xlu0 %v526, 112
      %v547 = vpop.permute.xlu0 %546
      %548 = vrot.lane.b32.xlu0 %v527, 112
      %v549 = vpop.permute.xlu0 %548
      %550 = vrot.lane.b32.xlu0 %v530, 112
      %v551 = vpop.permute.xlu0 %550
      %v552 = vsel %vm357, %v547, %v549
      %v553 = vsel %vm357, %v549, %v551
      %v556 = vsel %vm326, 0.0, %v552
      %v557 = vsel %vm327, 0.0, %v553
      %558 = vrot.lane.b32.xlu0 %v526, 110
      %v559 = vpop.permute.xlu0 %558
      %560 = vrot.lane.b32.xlu0 %v527, 110
      %v561 = vpop.permute.xlu0 %560
      %562 = vrot.lane.b32.xlu0 %v530, 110
      %v563 = vpop.permute.xlu0 %562
      %v564 = vsel %vm370, %v559, %v561
      %v565 = vsel %vm370, %v561, %v563
      %v568 = vsel %vm333, 0.0, %v564
      %v569 = vsel %vm334, 0.0, %v565
      %570 = vrot.lane.b32.xlu0 %v526, 96
      %v571 = vpop.permute.xlu0 %570
      %572 = vrot.lane.b32.xlu0 %v527, 96
      %v573 = vpop.permute.xlu0 %572
      %574 = vrot.lane.b32.xlu0 %v530, 96
      %v575 = vpop.permute.xlu0 %574
      %v576 = vsel %vm383, %v571, %v573
      %v577 = vsel %vm383, %v573, %v575
      %v580 = vsel %vm326, 0.0, %v576
      %v581 = vsel %vm327, 0.0, %v577
      %582 = vrot.lane.b32.xlu0 %v526, 94
      %v583 = vpop.permute.xlu0 %582
      %584 = vrot.lane.b32.xlu0 %v527, 94
      %v585 = vpop.permute.xlu0 %584
      %586 = vrot.lane.b32.xlu0 %v530, 94
      %v587 = vpop.permute.xlu0 %586
      %v588 = vsel %vm396, %v583, %v585
      %v589 = vsel %vm396, %v585, %v587
      %v592 = vsel %vm333, 0.0, %v588
      %v593 = vsel %vm334, 0.0, %v589
      %594 = vrot.lane.b32.xlu0 %v526, 127
      %v595 = vpop.permute.xlu0 %594
      %596 = vrot.lane.b32.xlu0 %v527, 127
      %v597 = vpop.permute.xlu0 %596
      %598 = vrot.lane.b32.xlu0 %v530, 127
      %v599 = vpop.permute.xlu0 %598
      %v600 = vsel %vm409, %v595, %v597
      %v601 = vsel %vm409, %v597, %v599
      %604 = vrot.lane.b32.xlu0 %v526, 111
      %v605 = vpop.permute.xlu0 %604
      %606 = vrot.lane.b32.xlu0 %v527, 111
      %v607 = vpop.permute.xlu0 %606
      %608 = vrot.lane.b32.xlu0 %v530, 111
      %v609 = vpop.permute.xlu0 %608
      %v610 = vsel %vm420, %v605, %v607
      %v611 = vsel %vm420, %v607, %v609
      %614 = vrot.lane.b32.xlu0 %v526, 95
      %v615 = vpop.permute.xlu0 %614
      %616 = vrot.lane.b32.xlu0 %v527, 95
      %v617 = vpop.permute.xlu0 %616
      %618 = vrot.lane.b32.xlu0 %v530, 95
      %v619 = vpop.permute.xlu0 %618
      %v620 = vsel %vm431, %v615, %v617
      %v621 = vsel %vm431, %v617, %v619
      %v625 = vsel %vm436, %v525, 0
      %627 = vmatpush.msra.mxu0 0.0
      %628 = vmatpush.msra.mxu0 0.0
      %629 = vmatpush.msra.mxu0 0.0
      %630 = vmatpush.msra.mxu0 0.0
      %631 = vmatpush.msra.mxu0 0.0
      %632 = vmatpush.msra.mxu0 0.0
      %633 = vmatpush.msra.mxu0 0.0
      %634 = vmatpush.msra.mxu0 %v592
      %635 = vmatpush.msra.mxu0 %v620
      %636 = vmatpush.msra.mxu0 %v580
      %637 = vmatpush.msra.mxu0 %v568
      %638 = vmatpush.msra.mxu0 %v610
      %639 = vmatpush.msra.mxu0 %v556
      %640 = vmatpush.msra.mxu0 %v544
      %641 = vmatpush.msra.mxu0 %v600
      %642 = vmatpush.msra.mxu0 %v528
      %643 = vmatmul.f32.gmra.mxu0 %v625
      %v644 = vpop.f32.mrf.mxu0
      %v645 = vadd.f32 0.0, %v644
      %646 = vdwg.mxu0
      %647 = vmatpush.msra.mxu0 0.0
      %648 = vmatpush.msra.mxu0 0.0
      %649 = vmatpush.msra.mxu0 0.0
      %650 = vmatpush.msra.mxu0 0.0
      %651 = vmatpush.msra.mxu0 0.0
      %652 = vmatpush.msra.mxu0 0.0
      %653 = vmatpush.msra.mxu0 0.0
      %654 = vmatpush.msra.mxu0 %v593
      %655 = vmatpush.msra.mxu0 %v621
      %656 = vmatpush.msra.mxu0 %v581
      %657 = vmatpush.msra.mxu0 %v569
      %658 = vmatpush.msra.mxu0 %v611
      %659 = vmatpush.msra.mxu0 %v557
      %660 = vmatpush.msra.mxu0 %v545
      %661 = vmatpush.msra.mxu0 %v601
      %662 = vmatpush.msra.mxu0 %v529
      %663 = vmatmul.f32.gmra.mxu0 %v625
      %v664 = vpop.f32.mrf.mxu0
      %v665 = vadd.f32 0.0, %v664
      %666 = vdwg.mxu0
      %668 = vset.pattern.permute.xlu0 0
      %669 = vperm.xlu0 %668, %v280
      %v670 = vpop.permute.xlu0 %669
      %v672 = vmul.f32 %v645, %v670
      %v673 = vmul.f32 %v665, %v670
      %675 = vset.pattern.permute.xlu0 0
      %676 = vperm.xlu0 %675, %v281
      %v677 = vpop.permute.xlu0 %676
      %v679 = vadd.f32 %v672, %v677
      %v680 = vadd.f32 %v673, %v677
      %vm681 = vcmp.ge.f32.partialorder %v679, 0.0
      %vm682 = vcmp.ge.f32.partialorder %v680, 0.0
      %v683 = vmul.f32 %v679, 0.2
      %v684 = vmul.f32 %v680, 0.2
      %v685 = vsel %vm681, %v679, %v683
      %v686 = vsel %vm682, %v680, %v684
      %v687 = vmul.f32 %v685, 1.4142135
      %v688 = vmul.f32 %v686, 1.4142135
      %v689 = vld [vmem:[%s4] sm:$0x7]
      %691 = vset.pattern.permute.xlu0 0
      %692 = vperm.xlu0 %691, %v282
      %v693 = vpop.permute.xlu0 %692
      %v695 = vmul.f32 %v687, %v693
      %v696 = vmul.f32 %v688, %v693
      %698 = vset.pattern.permute.xlu0 0
      %699 = vperm.xlu0 %698, %v283
      %v700 = vpop.permute.xlu0 %699
      %vm702 = vcmask 64512
      %v704 = vsel %vm702, %v689, 0
      %706 = vmatpush.msra.mxu0 0.0
      %707 = vmatpush.msra.mxu0 0.0
      %708 = vmatpush.msra.mxu0 0.0
      %709 = vmatpush.msra.mxu0 0.0
      %710 = vmatpush.msra.mxu0 0.0
      %711 = vmatpush.msra.mxu0 0.0
      %712 = vmatpush.msra.mxu0 0.0
      %713 = vmatpush.msra.mxu0 0.0
      %714 = vmatpush.msra.mxu0 0.0
      %715 = vmatpush.msra.mxu0 0.0
      %716 = vmatpush.msra.mxu0 0.0
      %717 = vmatpush.msra.mxu0 0.0
      %718 = vmatpush.msra.mxu0 0.0
      %719 = vmatpush.msra.mxu0 0.0
      %720 = vmatpush.msra.mxu0 0.0
      %721 = vmatpush.msra.mxu0 %v695
      %722 = vmatmul.f32.gmra.mxu0 %v704
      %v723 = vpop.f32.mrf.mxu0
      %v724 = vadd.f32 %v700, %v723
      %725 = vdwg.mxu0
      %726 = vmatpush.msra.mxu0 0.0
      %727 = vmatpush.msra.mxu0 0.0
      %728 = vmatpush.msra.mxu0 0.0
      %729 = vmatpush.msra.mxu0 0.0
      %730 = vmatpush.msra.mxu0 0.0
      %731 = vmatpush.msra.mxu0 0.0
      %732 = vmatpush.msra.mxu0 0.0
      %733 = vmatpush.msra.mxu0 0.0
      %734 = vmatpush.msra.mxu0 0.0
      %735 = vmatpush.msra.mxu0 0.0
      %736 = vmatpush.msra.mxu0 0.0
      %737 = vmatpush.msra.mxu0 0.0
      %738 = vmatpush.msra.mxu0 0.0
      %739 = vmatpush.msra.mxu0 0.0
      %740 = vmatpush.msra.mxu0 0.0
      %741 = vmatpush.msra.mxu0 %v696
      %742 = vmatmul.f32.gmra.mxu0 %v704
      %v743 = vpop.f32.mrf.mxu0
      %v744 = vadd.f32 %v700, %v743
      %745 = vdwg.mxu0
      %v746 = vld [vmem:[%s234] sm:$0x77]
      %v749 = vrot.slane %v744, 4
      %vm750 = vcmask 1043456
      %v751 = vsel %vm750, %v724, %v749
      %v753 = vadd.f32 %v746, %v751
      %754 = vst [vmem:[%s244] sm:$0x77] %v753
      %p755 = scmp.lt.s32.totalorder %s16, 1
      %s756 = scalar_select %p755, %s16, 1
      %s757 = smul.addr %s756, 2
      %s758 = smul.addr %s757, 4
      %s759 = scalar_lea.vmem %s5, %s758
      // Predicated region
      $region41: #{tpu_custom_call.1} parent=39 // pred_check
        %p760 = pneg %p149
      $region42: #{tpu_custom_call.1} parent=39 // pred_check_branch
        %762 = sbr.rel (%p760) target = $region44
      $region43: #{tpu_custom_call.1} parent=39 // pred_region
        _
      $region44: #{tpu_custom_call.1} parent=39 // pred_fallthru
        _
    $region40: #{tpu_custom_call.1} parent=5 // pred_fallthru
      _
    %p763 = scmp.le.s32.totalorder 2, %s11
    // Predicated region
    $region45: #{tpu_custom_call.1} parent=5 // pred_check
      %p764 = pneg %p763
    $region46: #{tpu_custom_call.1} parent=5 // pred_check_branch
      %766 = sbr.rel (%p764) target = $region48
    $region47: #{tpu_custom_call.1} parent=5 // pred_region
      %s767 = ssub.s32 %s11, 2
      // Predicated region
      $region49: #{tpu_custom_call.1} parent=47 // pred_check
        %p768 = pneg %p155
      $region50: #{tpu_custom_call.1} parent=47 // pred_check_branch
        %770 = sbr.rel (%p768) target = $region52
      $region51: #{tpu_custom_call.1} parent=47 // pred_region
        %p771 = scmp.lt.s32.totalorder %s17, 1
        %s772 = scalar_select %p771, %s17, 1
        %s773 = smul.addr %s772, 2
        %s774 = smul.addr %s773, 4
        %s775 = scalar_lea.vmem %s5, %s774
      $region52: #{tpu_custom_call.1} parent=47 // pred_fallthru
        _
    $region48: #{tpu_custom_call.1} parent=5 // pred_fallthru
      _
  $region6: #{tpu_custom_call.1} parent=0 // loop_footer
    %s15 = sadd.s32 1, %s11
  $region7: #{tpu_custom_call.1} parent=0 // loop_footer_branch
    %10 = sbr.rel target = $region3
  $region8: #{tpu_custom_call.1} parent=0 // loop_exit
    _

</llo_original>
